<compile_context>
chip_gen: v6e
topology: v6e:2x2x1
jax: 0.10.0
libtpu: 0.0.40
codegen_flags: <defaults>
</compile_context>

<pallas_src>
import math
import functools

import numpy as np
import jax
import jax.numpy as jnp
from jax import lax
from jax.experimental import pallas as pl
from jax.experimental.pallas import tpu as pltpu


# --------------------------------------------------------------------------- #
# Host-side helpers (exactly mirror Smoothing.compute_kernels)
# --------------------------------------------------------------------------- #
def _gaussian_taps(sigma):
    size_denom = 5.0
    sig_i = int(sigma * size_denom)
    if sig_i <= 0:
        raise ValueError(
            f"sigma={sigma} gives int(sigma*5)=={sig_i}; the reference module "
            "divides by zero here. Use sigma <= 0 for identity or sigma >= 0.2.")
    kernel_size = sig_i
    mgrid = np.arange(kernel_size, dtype=np.float32)
    mean = (kernel_size - 1.0) / 2.0
    mgrid = (mgrid - mean) * size_denom
    kernel = (1.0 / (sig_i * math.sqrt(2.0 * math.pi))) * np.exp(
        -((mgrid - 0.0) / sig_i) ** 2 * 0.5)
    kernel = kernel / kernel.sum()
    return kernel.astype(np.float32), kernel_size


def _conv_matrix(n, kern, pad_lo):
    """Banded Toeplitz A with A[r, c] = kern[c - r + pad_lo]; y = A @ x == H pass."""
    K = len(kern)
    A = np.zeros((n, n), dtype=np.float32)
    for r in range(n):
        for i in range(K):
            c = r + i - pad_lo
            if 0 <= c < n:
                A[r, c] = kern[i]
    return A


@functools.lru_cache(maxsize=1)
def _tpu_hw_info():
    """(num_tensorcores, per-core VMEM bytes) with conservative fallbacks."""
    cores = 1
    vmem = 64 * 1024 * 1024          # conservative default (v7x per-core VMEM)
    try:
        info = pltpu.get_tpu_info()
        for name in ("vmem_capacity_bytes", "vmem_size_bytes", "vmem_bytes"):
            v = getattr(info, name, None)
            if isinstance(v, (int, np.integer)) and v > 0:
                vmem = int(v)
                break
        for name in ("num_tensorcores", "tensorcore_count", "num_cores",
                     "cores_per_chip", "num_tensor_cores"):
            v = getattr(info, name, None)
            if isinstance(v, (int, np.integer)) and v > 0:
                cores = int(v)
                break
    except Exception:
        pass
    try:
        kind = jax.devices()[0].device_kind.lower().replace(" ", "")
        if "v7" in kind:
            cores = max(cores, 2)
            vmem = min(vmem, 64 * 1024 * 1024)
    except Exception:
        pass
    return cores, vmem


def _plan_blocks(P, plane_elems, itemsize, num_cores, vmem_bytes, f32_temps):
    """Planes-per-block B and grid size G: ~4 MiB HBM blocks that fit VMEM."""
    target_hbm = 4 << 20
    plane_hbm = max(1, plane_elems * itemsize)
    # double-buffered in+out in caller dtype + compiler-managed f32 temporaries
    per_plane_vmem = max(1, plane_elems * (4 * itemsize + f32_temps * 4))
    budget = max(per_plane_vmem, int(vmem_bytes * 0.55))
    cap = min(target_hbm // plane_hbm, budget // per_plane_vmem)
    cap = max(1, min(int(cap), P))
    if cap >= 8:
        cap = (cap // 8) * 8                      # multiple of 8 sublanes
    if num_cores > 1:
        # Give every TensorCore >= 2 grid steps so prologue/epilogue DMAs hide.
        min_steps = 2 * num_cores
        while cap > 1 and pl.cdiv(P, cap) < min_steps:
            nxt = cap // 2
            if nxt >= 8:
                nxt = (nxt // 8) * 8
            cap = max(1, nxt)
    B = cap
    G = pl.cdiv(P, B)
    return B, G


def _vmem_limit_bytes(block_in, block_out, f32_work, extra, vmem_cap):
    needed = 2 * (block_in + block_out) + f32_work + extra + (4 << 20)
    limit = min(max(needed, 32 << 20), int(vmem_cap * 0.9))
    return int(max(limit, needed))


# --------------------------------------------------------------------------- #
# Kernels
# --------------------------------------------------------------------------- #
def _smooth_roll_kernel(x_ref, o_ref, *, kvals, H, W, K, pad_lo):
    """Separable K-tap blur of B planes flattened to (B, H*W) (H*W % 128 == 0).

    Shifted taps are produced with pltpu.roll (XLU) on the vreg-resident block;
    zero-padding / row-boundary handling is folded into per-tap (1, H*W)
    coefficient vectors, so each tap is {roll, mul, add}.
    """
    HW = H * W
    f32 = jnp.float32
    x = x_ref[0].astype(f32)                                      # (B, HW)

    p_idx = lax.broadcasted_iota(jnp.int32, (1, HW), 1)           # flat index
    w_idx = p_idx % W                                             # column index

    # ---- H pass: a shift of d rows is a roll by d*W lanes -------------------
    y = None
    for i in range(K):
        d = i - pad_lo
        if abs(d) >= H:
            continue                                 # tap entirely in the pad
        if d == 0:
            contrib = kvals[i] * x
        else:
            term = pltpu.roll(x, shift=(-d * W) % HW, axis=1)
            if d < 0:
                coef = jnp.where(p_idx >= (-d) * W, f32(kvals[i]), f32(0.0))
            else:
                coef = jnp.where(p_idx < HW - d * W, f32(kvals[i]), f32(0.0))
            contrib = coef * term
        y = contrib if y is None else y + contrib

    # ---- W pass: a shift of dj columns is a roll by dj lanes ----------------
    z = None
    for j in range(K):
        dj = j - pad_lo
        if abs(dj) >= W:
            continue
        if dj == 0:
            contrib = kvals[j] * y
        else:
            term = pltpu.roll(y, shift=(-dj) % HW, axis=1)
            if dj < 0:
                coef = jnp.where(w_idx >= -dj, f32(kvals[j]), f32(0.0))
            else:
                coef = jnp.where(w_idx < W - dj, f32(kvals[j]), f32(0.0))
            contrib = coef * term
        z = contrib if z is None else z + contrib

    o_ref[0] = z.astype(o_ref.dtype)                              # lane-dense store


def _smooth_scratch_kernel(x_ref, o_ref, xpad_ref, ypad_ref, *,
                           kvals, H, W, K, pad_lo):
    """Fallback for planes whose flattened size is not lane-aligned (H*W % 128 != 0).

    Same math as the roll kernel, but shifted taps are read as offset slices of
    small zero-padded VMEM scratch buffers (proven lowering path).
    """
    B = x_ref.shape[1]
    HW = H * W
    pad_hi = K - 1 - pad_lo
    f32 = jnp.float32

    x = x_ref[0].astype(f32)                                      # (B, HW)

    # ---- H pass -------------------------------------------------------------
    if pad_lo:
        xpad_ref[:, 0:pad_lo * W] = jnp.zeros((B, pad_lo * W), f32)
    if pad_hi:
        xpad_ref[:, pad_lo * W + HW:pad_lo * W + HW + pad_hi * W] = (
            jnp.zeros((B, pad_hi * W), f32))
    xpad_ref[:, pad_lo * W:pad_lo * W + HW] = x

    y = None
    for i in range(K):
        if abs(i - pad_lo) >= H:
            continue
        contrib = kvals[i] * xpad_ref[:, i * W:i * W + HW]
        y = contrib if y is None else y + contrib

    # ---- W pass -------------------------------------------------------------
    if pad_lo:
        ypad_ref[:, 0:pad_lo] = jnp.zeros((B, pad_lo), f32)
    if pad_hi:
        ypad_ref[:, pad_lo + HW:pad_lo + HW + pad_hi] = jnp.zeros((B, pad_hi), f32)
    ypad_ref[:, pad_lo:pad_lo + HW] = y

    w_idx = lax.broadcasted_iota(jnp.int32, (1, HW), 1) % W       # (1, HW), hoisted

    z = None
    for j in range(K):
        dj = j - pad_lo
        if abs(dj) >= W:
            continue
        term = ypad_ref[:, j:j + HW]
        if dj < 0:
            contrib = jnp.where(w_idx >= -dj, f32(kvals[j]), f32(0.0)) * term
        elif dj > 0:
            contrib = jnp.where(w_idx < W - dj, f32(kvals[j]), f32(0.0)) * term
        else:
            contrib = kvals[j] * term
        z = contrib if z is None else z + contrib

    o_ref[0] = z.astype(o_ref.dtype)


def _smooth_mxu_kernel(ah_ref, bw_ref, x_ref, o_ref):
    """One plane per grid step: out = A_h @ x @ B_w (banded Toeplitz, MXU)."""
    xb = x_ref[0].astype(jnp.float32)                             # (H, W)
    yb = jnp.dot(ah_ref[...], xb, preferred_element_type=jnp.float32)
    zb = jnp.dot(yb, bw_ref[...], preferred_element_type=jnp.float32)
    o_ref[0] = zb.astype(o_ref.dtype)


# --------------------------------------------------------------------------- #
# Dispatch wrappers
# --------------------------------------------------------------------------- #
def _forward_planes(x, kern, K, pad_lo, num_cores, vmem_cap, use_roll):
    N, C, H, W = x.shape
    P, HW = N * C, H * W
    itemsize = x.dtype.itemsize
    B, G = _plan_blocks(P, HW, itemsize, num_cores, vmem_cap, f32_temps=6)

    # Free reshape: planes flattened so the last dim is H*W (lane-dense I/O).
    xflat = x.reshape(P, HW)
    P_pad = G * B
    if P_pad != P:                       # tail planes padded, sliced off below
        xflat = jnp.pad(xflat, ((0, P_pad - P), (0, 0)))
    xr = xflat.reshape(G, B, HW)

    kvals = tuple(float(v) for v in kern)
    if use_roll:
        kernel_fn = functools.partial(_smooth_roll_kernel,
                                      kvals=kvals, H=H, W=W, K=K, pad_lo=pad_lo)
        scratch_shapes = []
        extra_scratch = 0
    else:
        kernel_fn = functools.partial(_smooth_scratch_kernel,
                                      kvals=kvals, H=H, W=W, K=K, pad_lo=pad_lo)
        scratch_shapes = [pltpu.VMEM((B, (K - 1) * W + HW), jnp.float32),
                          pltpu.VMEM((B, (K - 1) + HW), jnp.float32)]
        extra_scratch = 4 * (B * ((K - 1) * W + HW) + B * ((K - 1) + HW))

    blk_bytes = B * HW * itemsize
    vmem_limit = _vmem_limit_bytes(blk_bytes, blk_bytes, 6 * B * HW * 4,
                                   extra_scratch, vmem_cap)

    out = pl.pallas_call(
        kernel_fn,
        out_shape=jax.ShapeDtypeStruct((G, B, HW), x.dtype),
        grid=(G,),
        in_specs=[pl.BlockSpec((1, B, HW), lambda i: (i, 0, 0))],
        out_specs=pl.BlockSpec((1, B, HW), lambda i: (i, 0, 0)),
        scratch_shapes=scratch_shapes,
        compiler_params=pltpu.CompilerParams(
            dimension_semantics=("parallel",),
            vmem_limit_bytes=vmem_limit),
    )(xr)

    out = out.reshape(P_pad, HW)
    if P_pad != P:
        out = out[:P]
    return out.reshape(N, C, H, W)


def _forward_mxu(x, kern, pad_lo, vmem_cap):
    N, C, H, W = x.shape
    P = N * C
    itemsize = x.dtype.itemsize

    ah = jnp.asarray(_conv_matrix(H, kern, pad_lo))               # y = ah @ x
    bw = jnp.asarray(_conv_matrix(W, kern, pad_lo).T)             # z = y @ bw
    xr = x.reshape(P, H, W)

    plane_bytes = H * W * itemsize
    vmem_limit = _vmem_limit_bytes(plane_bytes, plane_bytes, 3 * H * W * 4,
                                   2 * 4 * (H * H + W * W), vmem_cap)

    out = pl.pallas_call(
        _smooth_mxu_kernel,
        out_shape=jax.ShapeDtypeStruct((P, H, W), x.dtype),
        grid=(P,),
        in_specs=[pl.BlockSpec((H, H), lambda p: (0, 0)),
                  pl.BlockSpec((W, W), lambda p: (0, 0)),
                  pl.BlockSpec((1, H, W), lambda p: (p, 0, 0))],
        out_specs=pl.BlockSpec((1, H, W), lambda p: (p, 0, 0)),
        compiler_params=pltpu.CompilerParams(
            dimension_semantics=("parallel",),
            vmem_limit_bytes=vmem_limit),
    )(ah, bw, xr)
    return out.reshape(N, C, H, W)


def smoothing_forward(x, sigma):
    """JAX/Pallas equivalent of Smoothing.forward(input, sigma); x is NCHW."""
    if sigma <= 0:
        return x

    N, C, H, W = x.shape
    kern, K = _gaussian_taps(sigma)
    pad_lo = K // 2 - (1 - K % 2)         # pad_hi = K - 1 - pad_lo
    HW = H * W
    num_cores, vmem_cap = _tpu_hw_info()

    # Candidate paths, fastest-first; later entries are safety-net fallbacks.
    candidates = []
    if min(H, W) >= 128 or (K >= 13 and min(H, W) >= 32):
        candidates.append(functools.partial(_forward_mxu, x, kern, pad_lo, vmem_cap))
    if HW % 128 == 0:
        candidates.append(functools.partial(
            _forward_planes, x, kern, K, pad_lo, num_cores, vmem_cap, True))
    candidates.append(functools.partial(
        _forward_planes, x, kern, K, pad_lo, num_cores, vmem_cap, False))

    last_err = None
    for idx, fn in enumerate(candidates):
        try:
            out = fn()
            if idx + 1 < len(candidates):
                jax.block_until_ready(out)   # surface lowering/runtime issues here
            return out
        except Exception as e:               # safety net: drop to the next path
            last_err = e
    raise last_err


# --------------------------------------------------------------------------- #
# Pure numpy reference (identical semantics) + self-check
# --------------------------------------------------------------------------- #
def _reference_forward(x, sigma):
    if sigma <= 0:
        return np.asarray(x)
    x = np.asarray(x, dtype=np.float32)
    N, C, H, W = x.shape
    kern, K = _gaussian_taps(sigma)
    padd0 = K // 2
    eo = 1 - (K % 2)
    xp = np.pad(x, ((0, 0), (0, 0), (padd0 - eo, padd0), (padd0 - eo, padd0)))
    y = np.zeros((N, C, H, xp.shape[3]), dtype=np.float32)
    for i in range(K):
        y += kern[i] * xp[:, :, i:i + H, :]
    z = np.zeros((N, C, H, W), dtype=np.float32)
    for j in range(K):
        z += kern[j] * y[:, :, :, j:j + W]
    return z


if __name__ == "__main__":
    key = jax.random.PRNGKey(0)

    # 1) Main test: roll path (H*W = 256 lane-aligned), odd K = 5.
    x = jax.random.normal(key, (2, 4, 16, 16), dtype=jnp.float32)
    out = jax.block_until_ready(smoothing_forward(x, 1))
    assert out.shape == (2, 4, 16, 16)
    np.testing.assert_allclose(np.asarray(out),
                               _reference_forward(np.asarray(x), 1),
                               rtol=1e-5, atol=1e-5)

    # 2) sigma <= 0 path is identity.
    out0 = jax.block_until_ready(smoothing_forward(x, 0))
    np.testing.assert_allclose(np.asarray(out0), np.asarray(x))

    # 3) Roll path with even K = 4 (asymmetric pad).
    out_e = jax.block_until_ready(smoothing_forward(x, 0.8))
    np.testing.assert_allclose(np.asarray(out_e),
                               _reference_forward(np.asarray(x), 0.8),
                               rtol=1e-5, atol=1e-5)

    # 4) Non-128-aligned H*W (144) -> scratch fallback; even K = 6; odd plane count.
    x2 = jax.random.normal(jax.random.PRNGKey(1), (1, 3, 12, 12), dtype=jnp.float32)
    out2 = jax.block_until_ready(smoothing_forward(x2, 1.2))
    np.testing.assert_allclose(np.asarray(out2),
                               _reference_forward(np.asarray(x2), 1.2),
                               rtol=1e-5, atol=1e-5)

    # 5) Plane count (12) not a multiple of the chosen block -> tail padding path.
    x3 = jax.random.normal(jax.random.PRNGKey(2), (3, 4, 16, 16), dtype=jnp.float32)
    out3 = jax.block_until_ready(smoothing_forward(x3, 1))
    np.testing.assert_allclose(np.asarray(out3),
                               _reference_forward(np.asarray(x3), 1),
                               rtol=1e-5, atol=1e-5)

    # 6) MXU (banded-Toeplitz matmul) path: 128x128 planes.
    x4 = jax.random.normal(jax.random.PRNGKey(3), (1, 2, 128, 128), dtype=jnp.float32)
    out4 = jax.block_until_ready(smoothing_forward(x4, 1))
    np.testing.assert_allclose(np.asarray(out4),
                               _reference_forward(np.asarray(x4), 1),
                               rtol=1e-5, atol=1e-5)

    # 7) MXU path triggered by large K (sigma=3 -> K=15) on 32x32 planes.
    x5 = jax.random.normal(jax.random.PRNGKey(4), (2, 2, 32, 32), dtype=jnp.float32)
    out5 = jax.block_until_ready(smoothing_forward(x5, 3))
    np.testing.assert_allclose(np.asarray(out5),
                               _reference_forward(np.asarray(x5), 3),
                               rtol=1e-5, atol=1e-5)

    print("KERNEL_OK")
</pallas_src>

<mosaic_0001>
module attributes {stable_mosaic.version = 11 : i64} {
  func.func @_smooth_roll_kernel(%arg0: i32, %arg1: memref<1x8x256xf32, #tpu.memory_space<vmem>>, %arg2: memref<1x8x256xf32, #tpu.memory_space<vmem>>) attributes {dimension_semantics = [#tpu.dimension_semantics<parallel>], iteration_bounds = array<i64: 1>, scalar_prefetch = 0 : i64, scratch_operands = 0 : i64, tpu.core_type = #tpu.core_type<tc>, window_params = [{transform_indices = @transform_0, window_bounds = array<i64: 1, 8, 256>}, {transform_indices = @transform_1, window_bounds = array<i64: 1, 8, 256>}]} {
    %c0 = arith.constant 0 : index
    %c0_0 = arith.constant 0 : index
    %c0_1 = arith.constant 0 : index
    %0 = vector.load %arg1[%c0, %c0_0, %c0_1] : memref<1x8x256xf32, #tpu.memory_space<vmem>>, vector<1x8x256xf32>
    %1 = vector.shape_cast %0 : vector<1x8x256xf32> to vector<8x256xf32>
    %2 = tpu.iota {dimensions = array<i32: 1>} : vector<1x256xi32>
    %c16_i32 = arith.constant 16 : i32
    %c0_i32 = arith.constant 0 : i32
    %3 = arith.cmpi eq, %c16_i32, %c0_i32 : i32
    %c1_i32 = arith.constant 1 : i32
    %4 = arith.select %3, %c1_i32, %c16_i32 : i32
    %5 = vector.broadcast %4 : i32 to vector<1x256xi32>
    %6 = arith.remsi %2, %5 : vector<1x256xi32>
    %c0_i32_2 = arith.constant 0 : i32
    %7 = vector.broadcast %c0_i32_2 : i32 to vector<1x256xi32>
    %8 = arith.cmpi ne, %6, %7 : vector<1x256xi32>
    %c0_i32_3 = arith.constant 0 : i32
    %9 = vector.broadcast %c0_i32_3 : i32 to vector<1x256xi32>
    %10 = arith.cmpi slt, %6, %9 : vector<1x256xi32>
    %c0_i32_4 = arith.constant 0 : i32
    %11 = arith.cmpi slt, %4, %c0_i32_4 : i32
    %12 = vector.broadcast %11 : i1 to vector<1x256xi1>
    %13 = vector.broadcast %12 : vector<1x256xi1> to vector<1x256xi1>
    %14 = arith.xori %10, %13 : vector<1x256xi1>
    %15 = arith.andi %14, %8 : vector<1x256xi1>
    %16 = vector.broadcast %4 : i32 to vector<1x256xi32>
    %17 = arith.addi %6, %16 : vector<1x256xi32>
    %18 = arith.select %15, %17, %6 : vector<1x256xi1>, vector<1x256xi32>
    %c32_i32 = arith.constant 32 : i32
    %19 = tpu.dynamic_rotate %1 by %c32_i32 dim 1 : vector<8x256xf32>, i32 -> vector<8x256xf32>
    %c32_i32_5 = arith.constant 32 : i32
    %20 = vector.broadcast %c32_i32_5 : i32 to vector<1x256xi32>
    %21 = arith.cmpi sge, %2, %20 : vector<1x256xi32>
    %cst = arith.constant 0.054488685 : f32
    %cst_6 = arith.constant 0.000000e+00 : f32
    %22 = vector.broadcast %cst : f32 to vector<1x256xf32>
    %23 = vector.broadcast %cst_6 : f32 to vector<1x256xf32>
    %24 = arith.select %21, %22, %23 : vector<1x256xi1>, vector<1x256xf32>
    %25 = vector.broadcast %24 : vector<1x256xf32> to vector<8x256xf32>
    %26 = arith.mulf %25, %19 : vector<8x256xf32>
    %c16_i32_7 = arith.constant 16 : i32
    %27 = tpu.dynamic_rotate %1 by %c16_i32_7 dim 1 : vector<8x256xf32>, i32 -> vector<8x256xf32>
    %c16_i32_8 = arith.constant 16 : i32
    %28 = vector.broadcast %c16_i32_8 : i32 to vector<1x256xi32>
    %29 = arith.cmpi sge, %2, %28 : vector<1x256xi32>
    %cst_9 = arith.constant 0.244201347 : f32
    %cst_10 = arith.constant 0.000000e+00 : f32
    %30 = vector.broadcast %cst_9 : f32 to vector<1x256xf32>
    %31 = vector.broadcast %cst_10 : f32 to vector<1x256xf32>
    %32 = arith.select %29, %30, %31 : vector<1x256xi1>, vector<1x256xf32>
    %33 = vector.broadcast %32 : vector<1x256xf32> to vector<8x256xf32>
    %34 = arith.mulf %33, %27 : vector<8x256xf32>
    %35 = arith.addf %26, %34 : vector<8x256xf32>
    %cst_11 = arith.constant 0.402619958 : f32
    %36 = vector.broadcast %cst_11 : f32 to vector<8x256xf32>
    %37 = arith.mulf %36, %1 : vector<8x256xf32>
    %38 = arith.addf %35, %37 : vector<8x256xf32>
    %c240_i32 = arith.constant 240 : i32
    %39 = tpu.dynamic_rotate %1 by %c240_i32 dim 1 : vector<8x256xf32>, i32 -> vector<8x256xf32>
    %c240_i32_12 = arith.constant 240 : i32
    %40 = vector.broadcast %c240_i32_12 : i32 to vector<1x256xi32>
    %41 = arith.cmpi slt, %2, %40 : vector<1x256xi32>
    %cst_13 = arith.constant 0.244201347 : f32
    %cst_14 = arith.constant 0.000000e+00 : f32
    %42 = vector.broadcast %cst_13 : f32 to vector<1x256xf32>
    %43 = vector.broadcast %cst_14 : f32 to vector<1x256xf32>
    %44 = arith.select %41, %42, %43 : vector<1x256xi1>, vector<1x256xf32>
    %45 = vector.broadcast %44 : vector<1x256xf32> to vector<8x256xf32>
    %46 = arith.mulf %45, %39 : vector<8x256xf32>
    %47 = arith.addf %38, %46 : vector<8x256xf32>
    %c224_i32 = arith.constant 224 : i32
    %48 = tpu.dynamic_rotate %1 by %c224_i32 dim 1 : vector<8x256xf32>, i32 -> vector<8x256xf32>
    %c224_i32_15 = arith.constant 224 : i32
    %49 = vector.broadcast %c224_i32_15 : i32 to vector<1x256xi32>
    %50 = arith.cmpi slt, %2, %49 : vector<1x256xi32>
    %cst_16 = arith.constant 0.054488685 : f32
    %cst_17 = arith.constant 0.000000e+00 : f32
    %51 = vector.broadcast %cst_16 : f32 to vector<1x256xf32>
    %52 = vector.broadcast %cst_17 : f32 to vector<1x256xf32>
    %53 = arith.select %50, %51, %52 : vector<1x256xi1>, vector<1x256xf32>
    %54 = vector.broadcast %53 : vector<1x256xf32> to vector<8x256xf32>
    %55 = arith.mulf %54, %48 : vector<8x256xf32>
    %56 = arith.addf %47, %55 : vector<8x256xf32>
    %c2_i32 = arith.constant 2 : i32
    %57 = tpu.dynamic_rotate %56 by %c2_i32 dim 1 : vector<8x256xf32>, i32 -> vector<8x256xf32>
    %c2_i32_18 = arith.constant 2 : i32
    %58 = vector.broadcast %c2_i32_18 : i32 to vector<1x256xi32>
    %59 = arith.cmpi sge, %18, %58 : vector<1x256xi32>
    %cst_19 = arith.constant 0.054488685 : f32
    %cst_20 = arith.constant 0.000000e+00 : f32
    %60 = vector.broadcast %cst_19 : f32 to vector<1x256xf32>
    %61 = vector.broadcast %cst_20 : f32 to vector<1x256xf32>
    %62 = arith.select %59, %60, %61 : vector<1x256xi1>, vector<1x256xf32>
    %63 = vector.broadcast %62 : vector<1x256xf32> to vector<8x256xf32>
    %64 = arith.mulf %63, %57 : vector<8x256xf32>
    %c1_i32_21 = arith.constant 1 : i32
    %65 = tpu.dynamic_rotate %56 by %c1_i32_21 dim 1 : vector<8x256xf32>, i32 -> vector<8x256xf32>
    %c1_i32_22 = arith.constant 1 : i32
    %66 = vector.broadcast %c1_i32_22 : i32 to vector<1x256xi32>
    %67 = arith.cmpi sge, %18, %66 : vector<1x256xi32>
    %cst_23 = arith.constant 0.244201347 : f32
    %cst_24 = arith.constant 0.000000e+00 : f32
    %68 = vector.broadcast %cst_23 : f32 to vector<1x256xf32>
    %69 = vector.broadcast %cst_24 : f32 to vector<1x256xf32>
    %70 = arith.select %67, %68, %69 : vector<1x256xi1>, vector<1x256xf32>
    %71 = vector.broadcast %70 : vector<1x256xf32> to vector<8x256xf32>
    %72 = arith.mulf %71, %65 : vector<8x256xf32>
    %73 = arith.addf %64, %72 : vector<8x256xf32>
    %cst_25 = arith.constant 0.402619958 : f32
    %74 = vector.broadcast %cst_25 : f32 to vector<8x256xf32>
    %75 = arith.mulf %74, %56 : vector<8x256xf32>
    %76 = arith.addf %73, %75 : vector<8x256xf32>
    %c255_i32 = arith.constant 255 : i32
    %77 = tpu.dynamic_rotate %56 by %c255_i32 dim 1 : vector<8x256xf32>, i32 -> vector<8x256xf32>
    %c15_i32 = arith.constant 15 : i32
    %78 = vector.broadcast %c15_i32 : i32 to vector<1x256xi32>
    %79 = arith.cmpi slt, %18, %78 : vector<1x256xi32>
    %cst_26 = arith.constant 0.244201347 : f32
    %cst_27 = arith.constant 0.000000e+00 : f32
    %80 = vector.broadcast %cst_26 : f32 to vector<1x256xf32>
    %81 = vector.broadcast %cst_27 : f32 to vector<1x256xf32>
    %82 = arith.select %79, %80, %81 : vector<1x256xi1>, vector<1x256xf32>
    %83 = vector.broadcast %82 : vector<1x256xf32> to vector<8x256xf32>
    %84 = arith.mulf %83, %77 : vector<8x256xf32>
    %85 = arith.addf %76, %84 : vector<8x256xf32>
    %c254_i32 = arith.constant 254 : i32
    %86 = tpu.dynamic_rotate %56 by %c254_i32 dim 1 : vector<8x256xf32>, i32 -> vector<8x256xf32>
    %c14_i32 = arith.constant 14 : i32
    %87 = vector.broadcast %c14_i32 : i32 to vector<1x256xi32>
    %88 = arith.cmpi slt, %18, %87 : vector<1x256xi32>
    %cst_28 = arith.constant 0.054488685 : f32
    %cst_29 = arith.constant 0.000000e+00 : f32
    %89 = vector.broadcast %cst_28 : f32 to vector<1x256xf32>
    %90 = vector.broadcast %cst_29 : f32 to vector<1x256xf32>
    %91 = arith.select %88, %89, %90 : vector<1x256xi1>, vector<1x256xf32>
    %92 = vector.broadcast %91 : vector<1x256xf32> to vector<8x256xf32>
    %93 = arith.mulf %92, %86 : vector<8x256xf32>
    %94 = arith.addf %85, %93 : vector<8x256xf32>
    %c0_30 = arith.constant 0 : index
    %c0_31 = arith.constant 0 : index
    %c0_32 = arith.constant 0 : index
    %95 = vector.load %arg2[%c0_30, %c0_31, %c0_32] : memref<1x8x256xf32, #tpu.memory_space<vmem>>, vector<1x8x256xf32>
    %96 = vector.shape_cast %95 : vector<1x8x256xf32> to vector<8x256xf32>
    %97 = vector.shape_cast %94 : vector<8x256xf32> to vector<1x8x256xf32>
    tpu.vector_store %arg2[%c0_30, %c0_31, %c0_32], %97 {strides = array<i32>} : memref<1x8x256xf32, #tpu.memory_space<vmem>>, vector<1x8x256xf32>,
    return
  }
  func.func @transform_0(%arg0: i32) -> (i32, i32, i32) {
    %c0_i32 = arith.constant 0 : i32
    %c0_i32_0 = arith.constant 0 : i32
    %c0_i32_1 = arith.constant 0 : i32
    return %arg0, %c0_i32, %c0_i32_0 : i32, i32, i32
  }
  func.func @transform_1(%arg0: i32) -> (i32, i32, i32) {
    %c0_i32 = arith.constant 0 : i32
    %c0_i32_0 = arith.constant 0 : i32
    %c0_i32_1 = arith.constant 0 : i32
    return %arg0, %c0_i32, %c0_i32_0 : i32, i32, i32
  }
}

module attributes {stable_mosaic.version = 11 : i64} {
  func.func @_smooth_scratch_kernel(%arg0: i32, %arg1: memref<1x8x256xf32, #tpu.memory_space<vmem>>, %arg2: memref<1x8x256xf32, #tpu.memory_space<vmem>>, %arg3: memref<8x320xf32, #tpu.memory_space<vmem>>, %arg4: memref<8x260xf32, #tpu.memory_space<vmem>>) attributes {dimension_semantics = [#tpu.dimension_semantics<parallel>], iteration_bounds = array<i64: 1>, scalar_prefetch = 0 : i64, scratch_operands = 2 : i64, tpu.core_type = #tpu.core_type<tc>, window_params = [{transform_indices = @transform_0, window_bounds = array<i64: 1, 8, 256>}, {transform_indices = @transform_1, window_bounds = array<i64: 1, 8, 256>}]} {
    %c0 = arith.constant 0 : index
    %c0_0 = arith.constant 0 : index
    %c0_1 = arith.constant 0 : index
    %0 = vector.load %arg1[%c0, %c0_0, %c0_1] : memref<1x8x256xf32, #tpu.memory_space<vmem>>, vector<1x8x256xf32>
    %1 = vector.shape_cast %0 : vector<1x8x256xf32> to vector<8x256xf32>
    %cst = arith.constant 0.000000e+00 : f32
    %2 = vector.broadcast %cst : f32 to vector<8x32xf32>
    %c0_2 = arith.constant 0 : index
    %c0_3 = arith.constant 0 : index
    %3 = vector.load %arg3[%c0_2, %c0_3] : memref<8x320xf32, #tpu.memory_space<vmem>>, vector<8x32xf32>
    tpu.vector_store %arg3[%c0_2, %c0_3], %2 {strides = array<i32>} : memref<8x320xf32, #tpu.memory_space<vmem>>, vector<8x32xf32>,
    %cst_4 = arith.constant 0.000000e+00 : f32
    %4 = vector.broadcast %cst_4 : f32 to vector<8x32xf32>
    %c0_5 = arith.constant 0 : index
    %c288 = arith.constant 288 : index
    %5 = vector.load %arg3[%c0_5, %c288] : memref<8x320xf32, #tpu.memory_space<vmem>>, vector<8x32xf32>
    tpu.vector_store %arg3[%c0_5, %c288], %4 {strides = array<i32>} : memref<8x320xf32, #tpu.memory_space<vmem>>, vector<8x32xf32>,
    %c0_6 = arith.constant 0 : index
    %c32 = arith.constant 32 : index
    %6 = vector.load %arg3[%c0_6, %c32] : memref<8x320xf32, #tpu.memory_space<vmem>>, vector<8x256xf32>
    tpu.vector_store %arg3[%c0_6, %c32], %1 {strides = array<i32>} : memref<8x320xf32, #tpu.memory_space<vmem>>, vector<8x256xf32>,
    %c0_7 = arith.constant 0 : index
    %c0_8 = arith.constant 0 : index
    %7 = vector.load %arg3[%c0_7, %c0_8] : memref<8x320xf32, #tpu.memory_space<vmem>>, vector<8x256xf32>
    %cst_9 = arith.constant 0.054488685 : f32
    %8 = vector.broadcast %cst_9 : f32 to vector<8x256xf32>
    %9 = arith.mulf %8, %7 : vector<8x256xf32>
    %c0_10 = arith.constant 0 : index
    %c16 = arith.constant 16 : index
    %10 = vector.load %arg3[%c0_10, %c16] : memref<8x320xf32, #tpu.memory_space<vmem>>, vector<8x256xf32>
    %cst_11 = arith.constant 0.244201347 : f32
    %11 = vector.broadcast %cst_11 : f32 to vector<8x256xf32>
    %12 = arith.mulf %11, %10 : vector<8x256xf32>
    %13 = arith.addf %9, %12 : vector<8x256xf32>
    %c0_12 = arith.constant 0 : index
    %c32_13 = arith.constant 32 : index
    %14 = vector.load %arg3[%c0_12, %c32_13] : memref<8x320xf32, #tpu.memory_space<vmem>>, vector<8x256xf32>
    %cst_14 = arith.constant 0.402619958 : f32
    %15 = vector.broadcast %cst_14 : f32 to vector<8x256xf32>
    %16 = arith.mulf %15, %14 : vector<8x256xf32>
    %17 = arith.addf %13, %16 : vector<8x256xf32>
    %c0_15 = arith.constant 0 : index
    %c48 = arith.constant 48 : index
    %18 = vector.load %arg3[%c0_15, %c48] : memref<8x320xf32, #tpu.memory_space<vmem>>, vector<8x256xf32>
    %cst_16 = arith.constant 0.244201347 : f32
    %19 = vector.broadcast %cst_16 : f32 to vector<8x256xf32>
    %20 = arith.mulf %19, %18 : vector<8x256xf32>
    %21 = arith.addf %17, %20 : vector<8x256xf32>
    %c0_17 = arith.constant 0 : index
    %c64 = arith.constant 64 : index
    %22 = vector.load %arg3[%c0_17, %c64] : memref<8x320xf32, #tpu.memory_space<vmem>>, vector<8x256xf32>
    %cst_18 = arith.constant 0.054488685 : f32
    %23 = vector.broadcast %cst_18 : f32 to vector<8x256xf32>
    %24 = arith.mulf %23, %22 : vector<8x256xf32>
    %25 = arith.addf %21, %24 : vector<8x256xf32>
    %cst_19 = arith.constant 0.000000e+00 : f32
    %26 = vector.broadcast %cst_19 : f32 to vector<8x2xf32>
    %c0_20 = arith.constant 0 : index
    %c0_21 = arith.constant 0 : index
    %27 = vector.load %arg4[%c0_20, %c0_21] : memref<8x260xf32, #tpu.memory_space<vmem>>, vector<8x2xf32>
    tpu.vector_store %arg4[%c0_20, %c0_21], %26 {strides = array<i32>} : memref<8x260xf32, #tpu.memory_space<vmem>>, vector<8x2xf32>,
    %cst_22 = arith.constant 0.000000e+00 : f32
    %28 = vector.broadcast %cst_22 : f32 to vector<8x2xf32>
    %c0_23 = arith.constant 0 : index
    %c258 = arith.constant 258 : index
    %29 = vector.load %arg4[%c0_23, %c258] : memref<8x260xf32, #tpu.memory_space<vmem>>, vector<8x2xf32>
    tpu.vector_store %arg4[%c0_23, %c258], %28 {strides = array<i32>} : memref<8x260xf32, #tpu.memory_space<vmem>>, vector<8x2xf32>,
    %c0_24 = arith.constant 0 : index
    %c2 = arith.constant 2 : index
    %30 = vector.load %arg4[%c0_24, %c2] : memref<8x260xf32, #tpu.memory_space<vmem>>, vector<8x256xf32>
    tpu.vector_store %arg4[%c0_24, %c2], %25 {strides = array<i32>} : memref<8x260xf32, #tpu.memory_space<vmem>>, vector<8x256xf32>,
    %31 = tpu.iota {dimensions = array<i32: 1>} : vector<1x256xi32>
    %c16_i32 = arith.constant 16 : i32
    %c0_i32 = arith.constant 0 : i32
    %32 = arith.cmpi eq, %c16_i32, %c0_i32 : i32
    %c1_i32 = arith.constant 1 : i32
    %33 = arith.select %32, %c1_i32, %c16_i32 : i32
    %34 = vector.broadcast %33 : i32 to vector<1x256xi32>
    %35 = arith.remsi %31, %34 : vector<1x256xi32>
    %c0_i32_25 = arith.constant 0 : i32
    %36 = vector.broadcast %c0_i32_25 : i32 to vector<1x256xi32>
    %37 = arith.cmpi ne, %35, %36 : vector<1x256xi32>
    %c0_i32_26 = arith.constant 0 : i32
    %38 = vector.broadcast %c0_i32_26 : i32 to vector<1x256xi32>
    %39 = arith.cmpi slt, %35, %38 : vector<1x256xi32>
    %c0_i32_27 = arith.constant 0 : i32
    %40 = arith.cmpi slt, %33, %c0_i32_27 : i32
    %41 = vector.broadcast %40 : i1 to vector<1x256xi1>
    %42 = vector.broadcast %41 : vector<1x256xi1> to vector<1x256xi1>
    %43 = arith.xori %39, %42 : vector<1x256xi1>
    %44 = arith.andi %43, %37 : vector<1x256xi1>
    %45 = vector.broadcast %33 : i32 to vector<1x256xi32>
    %46 = arith.addi %35, %45 : vector<1x256xi32>
    %47 = arith.select %44, %46, %35 : vector<1x256xi1>, vector<1x256xi32>
    %c0_28 = arith.constant 0 : index
    %c0_29 = arith.constant 0 : index
    %48 = vector.load %arg4[%c0_28, %c0_29] : memref<8x260xf32, #tpu.memory_space<vmem>>, vector<8x256xf32>
    %c2_i32 = arith.constant 2 : i32
    %49 = vector.broadcast %c2_i32 : i32 to vector<1x256xi32>
    %50 = arith.cmpi sge, %47, %49 : vector<1x256xi32>
    %cst_30 = arith.constant 0.054488685 : f32
    %cst_31 = arith.constant 0.000000e+00 : f32
    %51 = vector.broadcast %cst_30 : f32 to vector<1x256xf32>
    %52 = vector.broadcast %cst_31 : f32 to vector<1x256xf32>
    %53 = arith.select %50, %51, %52 : vector<1x256xi1>, vector<1x256xf32>
    %54 = vector.broadcast %53 : vector<1x256xf32> to vector<8x256xf32>
    %55 = arith.mulf %54, %48 : vector<8x256xf32>
    %c0_32 = arith.constant 0 : index
    %c1 = arith.constant 1 : index
    %56 = vector.load %arg4[%c0_32, %c1] : memref<8x260xf32, #tpu.memory_space<vmem>>, vector<8x256xf32>
    %c1_i32_33 = arith.constant 1 : i32
    %57 = vector.broadcast %c1_i32_33 : i32 to vector<1x256xi32>
    %58 = arith.cmpi sge, %47, %57 : vector<1x256xi32>
    %cst_34 = arith.constant 0.244201347 : f32
    %cst_35 = arith.constant 0.000000e+00 : f32
    %59 = vector.broadcast %cst_34 : f32 to vector<1x256xf32>
    %60 = vector.broadcast %cst_35 : f32 to vector<1x256xf32>
    %61 = arith.select %58, %59, %60 : vector<1x256xi1>, vector<1x256xf32>
    %62 = vector.broadcast %61 : vector<1x256xf32> to vector<8x256xf32>
    %63 = arith.mulf %62, %56 : vector<8x256xf32>
    %64 = arith.addf %55, %63 : vector<8x256xf32>
    %c0_36 = arith.constant 0 : index
    %c2_37 = arith.constant 2 : index
    %65 = vector.load %arg4[%c0_36, %c2_37] : memref<8x260xf32, #tpu.memory_space<vmem>>, vector<8x256xf32>
    %cst_38 = arith.constant 0.402619958 : f32
    %66 = vector.broadcast %cst_38 : f32 to vector<8x256xf32>
    %67 = arith.mulf %66, %65 : vector<8x256xf32>
    %68 = arith.addf %64, %67 : vector<8x256xf32>
    %c0_39 = arith.constant 0 : index
    %c3 = arith.constant 3 : index
    %69 = vector.load %arg4[%c0_39, %c3] : memref<8x260xf32, #tpu.memory_space<vmem>>, vector<8x256xf32>
    %c15_i32 = arith.constant 15 : i32
    %70 = vector.broadcast %c15_i32 : i32 to vector<1x256xi32>
    %71 = arith.cmpi slt, %47, %70 : vector<1x256xi32>
    %cst_40 = arith.constant 0.244201347 : f32
    %cst_41 = arith.constant 0.000000e+00 : f32
    %72 = vector.broadcast %cst_40 : f32 to vector<1x256xf32>
    %73 = vector.broadcast %cst_41 : f32 to vector<1x256xf32>
    %74 = arith.select %71, %72, %73 : vector<1x256xi1>, vector<1x256xf32>
    %75 = vector.broadcast %74 : vector<1x256xf32> to vector<8x256xf32>
    %76 = arith.mulf %75, %69 : vector<8x256xf32>
    %77 = arith.addf %68, %76 : vector<8x256xf32>
    %c0_42 = arith.constant 0 : index
    %c4 = arith.constant 4 : index
    %78 = vector.load %arg4[%c0_42, %c4] : memref<8x260xf32, #tpu.memory_space<vmem>>, vector<8x256xf32>
    %c14_i32 = arith.constant 14 : i32
    %79 = vector.broadcast %c14_i32 : i32 to vector<1x256xi32>
    %80 = arith.cmpi slt, %47, %79 : vector<1x256xi32>
    %cst_43 = arith.constant 0.054488685 : f32
    %cst_44 = arith.constant 0.000000e+00 : f32
    %81 = vector.broadcast %cst_43 : f32 to vector<1x256xf32>
    %82 = vector.broadcast %cst_44 : f32 to vector<1x256xf32>
    %83 = arith.select %80, %81, %82 : vector<1x256xi1>, vector<1x256xf32>
    %84 = vector.broadcast %83 : vector<1x256xf32> to vector<8x256xf32>
    %85 = arith.mulf %84, %78 : vector<8x256xf32>
    %86 = arith.addf %77, %85 : vector<8x256xf32>
    %c0_45 = arith.constant 0 : index
    %c0_46 = arith.constant 0 : index
    %c0_47 = arith.constant 0 : index
    %87 = vector.load %arg2[%c0_45, %c0_46, %c0_47] : memref<1x8x256xf32, #tpu.memory_space<vmem>>, vector<1x8x256xf32>
    %88 = vector.shape_cast %87 : vector<1x8x256xf32> to vector<8x256xf32>
    %89 = vector.shape_cast %86 : vector<8x256xf32> to vector<1x8x256xf32>
    tpu.vector_store %arg2[%c0_45, %c0_46, %c0_47], %89 {strides = array<i32>} : memref<1x8x256xf32, #tpu.memory_space<vmem>>, vector<1x8x256xf32>,
    return
  }
  func.func @transform_0(%arg0: i32) -> (i32, i32, i32) {
    %c0_i32 = arith.constant 0 : i32
    %c0_i32_0 = arith.constant 0 : i32
    %c0_i32_1 = arith.constant 0 : i32
    return %arg0, %c0_i32, %c0_i32_0 : i32, i32, i32
  }
  func.func @transform_1(%arg0: i32) -> (i32, i32, i32) {
    %c0_i32 = arith.constant 0 : i32
    %c0_i32_0 = arith.constant 0 : i32
    %c0_i32_1 = arith.constant 0 : i32
    return %arg0, %c0_i32, %c0_i32_0 : i32, i32, i32
  }
}

</mosaic_0001>

<llo_original>
// kernel: tpu_custom_call.1
$region0: #{tpu_custom_call.1}
  #allocation0 [shape = 'u32[]', space=smem, size = 0x4, offset = 0x4, fixed_abs, tag = 'smem constant byte address 0x4 - core index']
  #allocation1 [shape = 'u32[144,128]{1,0:T(1,128)}', space=vmem, size = 0x12000, scoped, tag = 'internal scratch']
  %s0 = inlined_call_operand.hbm [shape: f32[1,8,256], index: 0, kind: input, shape index: {}]
  %s1 = inlined_call_operand.hbm [shape: f32[1,8,256], index: 1, kind: output, shape index: {}]
  %s2 = sld [smem:[#allocation0]]
  $region18: #{tpu_custom_call.1} parent=0
    _
  %s4 = ssub.s32 1, %s2
  %s5 = scalar_select 0, %s4, %s2
  $region1: #{tpu_custom_call.1} parent=0
    #allocation2 [shape = 'u8[8192]{0}', space=vmem, size = 0x2000, scoped, tag = 'input window, operand 0, single buffered']
    #allocation3 [shape = 's32[1]{0}', space=sflag, size = 0x4, scoped, tag = 'scoped memory for tpu_custom_call.1']
    #allocation4 [shape = 's32[1]{0}', space=sflag, size = 0x4, scoped, tag = 'scoped memory for tpu_custom_call.1']
    #allocation5 [shape = 'u8[8192]{0}', space=vmem, size = 0x2000, scoped, tag = 'output window, operand 0, single buffered']
    %6 = vsyncpa [#allocation3], 0
    %7 = vsyncpa [#allocation4], 0
    // Predicated region
    $region2: #{tpu_custom_call.1} parent=1 // pred_check
      _
    $region3: #{tpu_custom_call.1} parent=1 // pred_check_branch
      %9 = sbr.rel (0) target = $region5
    $region4: #{tpu_custom_call.1} parent=1 // pred_region
      %s11 = ssub.s32 256, 256
      %12 = vsyncadd [#allocation3], %s11
      %s14 = sshll.u32 [#allocation2], 4
      %s15 = int_to_ptr.vmem [resolvable:$true] %s14
      %17 = dma.hbm_to_vmem [thread:$0]  %s0, 256, %s15, [#allocation3]
    $region5: #{tpu_custom_call.1} parent=1 // pred_fallthru
      _
    // Predicated region
    $region6: #{tpu_custom_call.1} parent=1 // pred_check
      _
    $region7: #{tpu_custom_call.1} parent=1 // pred_check_branch
      %19 = sbr.rel (0) target = $region9
    $region8: #{tpu_custom_call.1} parent=1 // pred_region
      %20 = dma.done [#allocation3], 256
    $region9: #{tpu_custom_call.1} parent=1 // pred_fallthru
      _
    %v21 = vld [vmem:[#allocation2] sm:$0xff]
    %v22 = vld [vmem:[#allocation2 + $0x8] sm:$0xff]
    %v23 = vlaneseq
    %v24 = vand.u32 %v23, 127
    %v25 = vadd.s32 %v24, 128
    %vm26 = vcmp.lt.s32.totalorder %v24, 0
    %v27 = vsub.s32 0, %v24
    %v28 = vsel %vm26, %v27, %v24
    %v29 = vshrl.u32 %v28, 4
    %v30 = vand.u32 %v28, 15
    %v31 = vsub.s32 0, %v30
    %v32 = vsel %vm26, %v31, %v30
    %vm33 = vcmp.lt.s32.totalorder %v25, 0
    %v34 = vsub.s32 0, %v25
    %v35 = vsel %vm33, %v34, %v25
    %v36 = vshrl.u32 %v35, 4
    %v37 = vand.u32 %v35, 15
    %v38 = vsub.s32 0, %v37
    %v39 = vsel %vm33, %v38, %v37
    %vm40 = vcmp.ne.s32.totalorder %v32, 0
    %vm41 = vcmp.ne.s32.totalorder %v39, 0
    %vm42 = vcmp.lt.s32.totalorder %v32, 0
    %vm43 = vcmp.lt.s32.totalorder %v39, 0
    %vm44 = vmand %vm42, %vm40
    %vm45 = vmand %vm43, %vm41
    %v46 = vadd.s32 %v32, 16
    %v47 = vadd.s32 %v39, 16
    %v48 = vsel %vm44, %v46, %v32
    %v49 = vsel %vm45, %v47, %v39
    %50 = vrot.lane.b32.xlu0 %v21, 32
    %v51 = vpop.permute.xlu0 %50
    %52 = vrot.lane.b32.xlu0 %v22, 32
    %v53 = vpop.permute.xlu0 %52
    %vm54 = vcmp.lt.s32.totalorder %v24, 32
    %v55 = vsel %vm54, %v51, %v53
    %v56 = vsel %vm54, %v53, %v51
    %vm57 = vcmp.ge.s32.totalorder %v24, 32
    %vm58 = vcmp.ge.s32.totalorder %v25, 32
    %v59 = vsel %vm57, 0.054488685, 0.0
    %v60 = vsel %vm58, 0.054488685, 0.0
    %v61 = vmul.f32 %v59, %v56
    %v62 = vmul.f32 %v60, %v55
    %63 = vrot.lane.b32.xlu0 %v21, 16
    %v64 = vpop.permute.xlu0 %63
    %65 = vrot.lane.b32.xlu0 %v22, 16
    %v66 = vpop.permute.xlu0 %65
    %vm67 = vcmp.lt.s32.totalorder %v24, 16
    %v68 = vsel %vm67, %v64, %v66
    %v69 = vsel %vm67, %v66, %v64
    %vm70 = vcmp.ge.s32.totalorder %v24, 16
    %vm71 = vcmp.ge.s32.totalorder %v25, 16
    %v72 = vsel %vm70, 0.24420135, 0.0
    %v73 = vsel %vm71, 0.24420135, 0.0
    %v74 = vmul.f32 %v72, %v69
    %v75 = vmul.f32 %v73, %v68
    %v76 = vadd.f32 %v61, %v74
    %v77 = vadd.f32 %v62, %v75
    %v78 = vmul.f32 %v21, 0.40261996
    %v79 = vmul.f32 %v22, 0.40261996
    %v80 = vadd.f32 %v76, %v78
    %v81 = vadd.f32 %v77, %v79
    %82 = vrot.lane.b32.xlu0 %v21, 112
    %v83 = vpop.permute.xlu0 %82
    %84 = vrot.lane.b32.xlu0 %v22, 112
    %v85 = vpop.permute.xlu0 %84
    %vm86 = vcmp.lt.s32.totalorder %v24, 112
    %v87 = vsel %vm86, %v83, %v85
    %v88 = vsel %vm86, %v85, %v83
    %vm89 = vcmp.lt.s32.totalorder %v24, 240
    %vm90 = vcmp.lt.s32.totalorder %v25, 240
    %v91 = vsel %vm89, 0.24420135, 0.0
    %v92 = vsel %vm90, 0.24420135, 0.0
    %v93 = vmul.f32 %v91, %v87
    %v94 = vmul.f32 %v92, %v88
    %v95 = vadd.f32 %v80, %v93
    %v96 = vadd.f32 %v81, %v94
    %97 = vrot.lane.b32.xlu0 %v21, 96
    %v98 = vpop.permute.xlu0 %97
    %99 = vrot.lane.b32.xlu0 %v22, 96
    %v100 = vpop.permute.xlu0 %99
    %vm101 = vcmp.lt.s32.totalorder %v24, 96
    %v102 = vsel %vm101, %v98, %v100
    %v103 = vsel %vm101, %v100, %v98
    %vm104 = vcmp.lt.s32.totalorder %v24, 224
    %vm105 = vcmp.lt.s32.totalorder %v25, 224
    %v106 = vsel %vm104, 0.054488685, 0.0
    %v107 = vsel %vm105, 0.054488685, 0.0
    %v108 = vmul.f32 %v106, %v102
    %v109 = vmul.f32 %v107, %v103
    %v110 = vadd.f32 %v95, %v108
    %v111 = vadd.f32 %v96, %v109
    %112 = vrot.lane.b32.xlu0 %v110, 2
    %v113 = vpop.permute.xlu0 %112
    %114 = vrot.lane.b32.xlu0 %v111, 2
    %v115 = vpop.permute.xlu0 %114
    %vm116 = vcmp.lt.s32.totalorder %v24, 2
    %v117 = vsel %vm116, %v113, %v115
    %v118 = vsel %vm116, %v115, %v113
    %vm119 = vcmp.ge.s32.totalorder %v48, 2
    %vm120 = vcmp.ge.s32.totalorder %v49, 2
    %v121 = vsel %vm119, 0.054488685, 0.0
    %v122 = vsel %vm120, 0.054488685, 0.0
    %v123 = vmul.f32 %v121, %v118
    %v124 = vmul.f32 %v122, %v117
    %125 = vrot.lane.b32.xlu0 %v110, 1
    %v126 = vpop.permute.xlu0 %125
    %127 = vrot.lane.b32.xlu0 %v111, 1
    %v128 = vpop.permute.xlu0 %127
    %vm129 = vcmp.lt.s32.totalorder %v24, 1
    %v130 = vsel %vm129, %v126, %v128
    %v131 = vsel %vm129, %v128, %v126
    %vm132 = vcmp.ge.s32.totalorder %v48, 1
    %vm133 = vcmp.ge.s32.totalorder %v49, 1
    %v134 = vsel %vm132, 0.24420135, 0.0
    %v135 = vsel %vm133, 0.24420135, 0.0
    %v136 = vmul.f32 %v134, %v131
    %v137 = vmul.f32 %v135, %v130
    %v138 = vadd.f32 %v123, %v136
    %v139 = vadd.f32 %v124, %v137
    %v140 = vmul.f32 %v110, 0.40261996
    %v141 = vmul.f32 %v111, 0.40261996
    %v142 = vadd.f32 %v138, %v140
    %v143 = vadd.f32 %v139, %v141
    %144 = vrot.lane.b32.xlu0 %v110, 127
    %v145 = vpop.permute.xlu0 %144
    %146 = vrot.lane.b32.xlu0 %v111, 127
    %v147 = vpop.permute.xlu0 %146
    %vm148 = vcmp.lt.s32.totalorder %v24, 127
    %v149 = vsel %vm148, %v145, %v147
    %v150 = vsel %vm148, %v147, %v145
    %vm151 = vcmp.lt.s32.totalorder %v48, 15
    %vm152 = vcmp.lt.s32.totalorder %v49, 15
    %v153 = vsel %vm151, 0.24420135, 0.0
    %v154 = vsel %vm152, 0.24420135, 0.0
    %v155 = vmul.f32 %v153, %v149
    %v156 = vmul.f32 %v154, %v150
    %v157 = vadd.f32 %v142, %v155
    %v158 = vadd.f32 %v143, %v156
    %159 = vrot.lane.b32.xlu0 %v110, 126
    %v160 = vpop.permute.xlu0 %159
    %161 = vrot.lane.b32.xlu0 %v111, 126
    %v162 = vpop.permute.xlu0 %161
    %vm163 = vcmp.lt.s32.totalorder %v24, 126
    %v164 = vsel %vm163, %v160, %v162
    %v165 = vsel %vm163, %v162, %v160
    %vm166 = vcmp.lt.s32.totalorder %v48, 14
    %vm167 = vcmp.lt.s32.totalorder %v49, 14
    %v168 = vsel %vm166, 0.054488685, 0.0
    %v169 = vsel %vm167, 0.054488685, 0.0
    %v170 = vmul.f32 %v168, %v164
    %v171 = vmul.f32 %v169, %v165
    %v172 = vadd.f32 %v157, %v170
    %v173 = vadd.f32 %v158, %v171
    %174 = vst [vmem:[#allocation5] sm:$0xff] %v172
    %175 = vst [vmem:[#allocation5 + $0x8] sm:$0xff] %v173
    // Predicated region
    $region10: #{tpu_custom_call.1} parent=1 // pred_check
      _
    $region11: #{tpu_custom_call.1} parent=1 // pred_check_branch
      %177 = sbr.rel (0) target = $region13
    $region12: #{tpu_custom_call.1} parent=1 // pred_region
      %s179 = ssub.s32 256, 256
      %180 = vsyncadd [#allocation4], %s179
      %s182 = sshll.u32 [#allocation5], 4
      %s183 = int_to_ptr.vmem [resolvable:$true] %s182
      %185 = dma.vmem_to_hbm [thread:$0]  %s183, 256, %s1, [#allocation4]
    $region13: #{tpu_custom_call.1} parent=1 // pred_fallthru
      _
    // Predicated region
    $region14: #{tpu_custom_call.1} parent=1 // pred_check
      _
    $region15: #{tpu_custom_call.1} parent=1 // pred_check_branch
      %187 = sbr.rel (0) target = $region17
    $region16: #{tpu_custom_call.1} parent=1 // pred_region
      %188 = dma.done [#allocation4], 256
    $region17: #{tpu_custom_call.1} parent=1 // pred_fallthru
      _
    %189 = vsyncpa [#allocation3], 1
    %190 = vsyncpa [#allocation4], 1

// kernel: tpu_custom_call.1
$region0: #{tpu_custom_call.1}
  #allocation0 [shape = 'u32[]', space=smem, size = 0x4, offset = 0x4, fixed_abs, tag = 'smem constant byte address 0x4 - core index']
  #allocation1 [shape = 'u32[144,128]{1,0:T(1,128)}', space=vmem, size = 0x12000, scoped, tag = 'internal scratch']
  #allocation2 [shape = 'f32[8,320]{1,0:T(8,128)}', space=vmem, size = 0x3000, scoped, tag = 'scratch operand']
  #allocation3 [shape = 'f32[8,260]{1,0:T(8,128)}', space=vmem, size = 0x3000, scoped, tag = 'scratch operand']
  %s0 = inlined_call_operand.hbm [shape: f32[1,8,256], index: 0, kind: input, shape index: {}]
  %s1 = inlined_call_operand.hbm [shape: f32[1,8,256], index: 1, kind: output, shape index: {}]
  %s2 = sld [smem:[#allocation0]]
  $region18: #{tpu_custom_call.1} parent=0
    _
  %s4 = ssub.s32 1, %s2
  %s5 = scalar_select 0, %s4, %s2
  $region1: #{tpu_custom_call.1} parent=0
    #allocation4 [shape = 'u8[8192]{0}', space=vmem, size = 0x2000, scoped, tag = 'input window, operand 0, single buffered']
    #allocation5 [shape = 's32[1]{0}', space=sflag, size = 0x4, scoped, tag = 'scoped memory for tpu_custom_call.1']
    #allocation6 [shape = 's32[1]{0}', space=sflag, size = 0x4, scoped, tag = 'scoped memory for tpu_custom_call.1']
    #allocation7 [shape = 'u8[8192]{0}', space=vmem, size = 0x2000, scoped, tag = 'output window, operand 0, single buffered']
    %6 = vsyncpa [#allocation5], 0
    %7 = vsyncpa [#allocation6], 0
    // Predicated region
    $region2: #{tpu_custom_call.1} parent=1 // pred_check
      _
    $region3: #{tpu_custom_call.1} parent=1 // pred_check_branch
      %9 = sbr.rel (0) target = $region5
    $region4: #{tpu_custom_call.1} parent=1 // pred_region
      %s11 = ssub.s32 256, 256
      %12 = vsyncadd [#allocation5], %s11
      %s14 = sshll.u32 [#allocation4], 4
      %s15 = int_to_ptr.vmem [resolvable:$true] %s14
      %17 = dma.hbm_to_vmem [thread:$0]  %s0, 256, %s15, [#allocation5]
    $region5: #{tpu_custom_call.1} parent=1 // pred_fallthru
      _
    // Predicated region
    $region6: #{tpu_custom_call.1} parent=1 // pred_check
      _
    $region7: #{tpu_custom_call.1} parent=1 // pred_check_branch
      %19 = sbr.rel (0) target = $region9
    $region8: #{tpu_custom_call.1} parent=1 // pred_region
      %20 = dma.done [#allocation5], 256
    $region9: #{tpu_custom_call.1} parent=1 // pred_fallthru
      _
    %v21 = vld [vmem:[#allocation4] sm:$0xff]
    %v22 = vld [vmem:[#allocation4 + $0x8] sm:$0xff]
    %vm23 = vcmask 261120
    %24 = vst.msk [vmem:[#allocation2] sm:$0xff] %vm23, 0.0
    %vm25 = vcmask 523520
    %26 = vst.msk [vmem:[#allocation2 + $0x10] sm:$0xff] %vm25, 0.0
    %29 = vrot.lane.b32.xlu0 %v21, 32
    %v30 = vpop.permute.xlu0 %29
    %31 = vrot.lane.b32.xlu0 %v22, 32
    %v32 = vpop.permute.xlu0 %31
    %v33 = vsel %vm23, %v30, %v32
    %vm37 = vcmask 1047808
    %38 = vst.msk [vmem:[#allocation2] sm:$0xff] %vm37, %v30
    %39 = vst [vmem:[#allocation2 + $0x8] sm:$0xff] %v33
    %40 = vst.msk [vmem:[#allocation2 + $0x10] sm:$0xff] %vm23, %v32
    %v41 = vld [vmem:[#allocation2] sm:$0xff]
    %v42 = vld [vmem:[#allocation2 + $0x8] sm:$0xff]
    %v43 = vmul.f32 %v41, 0.054488685
    %v44 = vmul.f32 %v42, 0.054488685
    %v45 = vld [vmem:[#allocation2 + $0x10] sm:$0xff]
    %v46 = vmul.f32 %v41, 0.24420135
    %v47 = vmul.f32 %v42, 0.24420135
    %v48 = vmul.f32 %v45, 0.24420135
    %52 = vrot.lane.b32.xlu0 %v46, 112
    %v53 = vpop.permute.xlu0 %52
    %54 = vrot.lane.b32.xlu0 %v47, 112
    %v55 = vpop.permute.xlu0 %54
    %56 = vrot.lane.b32.xlu0 %v48, 112
    %v57 = vpop.permute.xlu0 %56
    %vm58 = vcmask 916480
    %v59 = vsel %vm58, %v53, %v55
    %v60 = vsel %vm58, %v55, %v57
    %v63 = vadd.f32 %v43, %v59
    %v64 = vadd.f32 %v44, %v60
    %v65 = vmul.f32 %v41, 0.40261996
    %v66 = vmul.f32 %v42, 0.40261996
    %v67 = vmul.f32 %v45, 0.40261996
    %71 = vrot.lane.b32.xlu0 %v65, 96
    %v72 = vpop.permute.xlu0 %71
    %73 = vrot.lane.b32.xlu0 %v66, 96
    %v74 = vpop.permute.xlu0 %73
    %75 = vrot.lane.b32.xlu0 %v67, 96
    %v76 = vpop.permute.xlu0 %75
    %vm77 = vcmask 785408
    %v78 = vsel %vm77, %v72, %v74
    %v79 = vsel %vm77, %v74, %v76
    %v82 = vadd.f32 %v63, %v78
    %v83 = vadd.f32 %v64, %v79
    %84 = vrot.lane.b32.xlu0 %v46, 80
    %v85 = vpop.permute.xlu0 %84
    %86 = vrot.lane.b32.xlu0 %v47, 80
    %v87 = vpop.permute.xlu0 %86
    %88 = vrot.lane.b32.xlu0 %v48, 80
    %v89 = vpop.permute.xlu0 %88
    %vm90 = vcmask 654336
    %v91 = vsel %vm90, %v85, %v87
    %v92 = vsel %vm90, %v87, %v89
    %v95 = vadd.f32 %v82, %v91
    %v96 = vadd.f32 %v83, %v92
    %v97 = vmul.f32 %v45, 0.054488685
    %101 = vrot.lane.b32.xlu0 %v43, 64
    %v102 = vpop.permute.xlu0 %101
    %103 = vrot.lane.b32.xlu0 %v44, 64
    %v104 = vpop.permute.xlu0 %103
    %105 = vrot.lane.b32.xlu0 %v97, 64
    %v106 = vpop.permute.xlu0 %105
    %vm107 = vcmask 523264
    %v108 = vsel %vm107, %v102, %v104
    %v109 = vsel %vm107, %v104, %v106
    %v112 = vadd.f32 %v95, %v108
    %v113 = vadd.f32 %v96, %v109
    %vm114 = vcmask 15360
    %115 = vst.msk [vmem:[#allocation3] sm:$0xff] %vm114, 0.0
    %vm116 = vcmask 31760
    %117 = vst.msk [vmem:[#allocation3 + $0x10] sm:$0xff] %vm116, 0.0
    %120 = vrot.lane.b32.xlu0 %v112, 2
    %v121 = vpop.permute.xlu0 %120
    %122 = vrot.lane.b32.xlu0 %v113, 2
    %v123 = vpop.permute.xlu0 %122
    %v124 = vsel %vm114, %v121, %v123
    %vm128 = vcmask 1047568
    %129 = vst.msk [vmem:[#allocation3] sm:$0xff] %vm128, %v121
    %130 = vst [vmem:[#allocation3 + $0x8] sm:$0xff] %v124
    %131 = vst.msk [vmem:[#allocation3 + $0x10] sm:$0xff] %vm114, %v123
    %v132 = vlaneseq
    %v133 = vand.u32 %v132, 127
    %v134 = vadd.s32 %v133, 128
    %vm135 = vcmp.lt.s32.totalorder %v133, 0
    %v136 = vsub.s32 0, %v133
    %v137 = vsel %vm135, %v136, %v133
    %v138 = vshrl.u32 %v137, 4
    %v139 = vand.u32 %v137, 15
    %v140 = vsub.s32 0, %v139
    %v141 = vsel %vm135, %v140, %v139
    %vm142 = vcmp.lt.s32.totalorder %v134, 0
    %v143 = vsub.s32 0, %v134
    %v144 = vsel %vm142, %v143, %v134
    %v145 = vshrl.u32 %v144, 4
    %v146 = vand.u32 %v144, 15
    %v147 = vsub.s32 0, %v146
    %v148 = vsel %vm142, %v147, %v146
    %vm149 = vcmp.ne.s32.totalorder %v141, 0
    %vm150 = vcmp.ne.s32.totalorder %v148, 0
    %vm151 = vcmp.lt.s32.totalorder %v141, 0
    %vm152 = vcmp.lt.s32.totalorder %v148, 0
    %vm153 = vmand %vm151, %vm149
    %vm154 = vmand %vm152, %vm150
    %v155 = vadd.s32 %v141, 16
    %v156 = vadd.s32 %v148, 16
    %v157 = vsel %vm153, %v155, %v141
    %v158 = vsel %vm154, %v156, %v148
    %v159 = vld [vmem:[#allocation3] sm:$0xff]
    %v160 = vld [vmem:[#allocation3 + $0x8] sm:$0xff]
    %vm161 = vcmp.ge.s32.totalorder %v157, 2
    %vm162 = vcmp.ge.s32.totalorder %v158, 2
    %v163 = vsel %vm161, 0.054488685, 0.0
    %v164 = vsel %vm162, 0.054488685, 0.0
    %v165 = vmul.f32 %v163, %v159
    %v166 = vmul.f32 %v164, %v160
    %v167 = vld [vmem:[#allocation3 + $0x10] sm:$0xff]
    %vm168 = vcmp.ge.s32.totalorder %v157, 1
    %vm169 = vcmp.ge.s32.totalorder %v158, 1
    %v170 = vsel %vm168, 0.24420135, 0.0
    %v171 = vsel %vm169, 0.24420135, 0.0
    %175 = vrot.lane.b32.xlu0 %v159, 127
    %v176 = vpop.permute.xlu0 %175
    %177 = vrot.lane.b32.xlu0 %v160, 127
    %v178 = vpop.permute.xlu0 %177
    %179 = vrot.lane.b32.xlu0 %v167, 127
    %v180 = vpop.permute.xlu0 %179
    %vm181 = vcmask 1039360
    %v182 = vsel %vm181, %v176, %v178
    %v183 = vsel %vm181, %v178, %v180
    %v186 = vmul.f32 %v170, %v182
    %v187 = vmul.f32 %v171, %v183
    %v188 = vadd.f32 %v165, %v186
    %v189 = vadd.f32 %v166, %v187
    %v190 = vmul.f32 %v159, 0.40261996
    %v191 = vmul.f32 %v160, 0.40261996
    %v192 = vmul.f32 %v167, 0.40261996
    %196 = vrot.lane.b32.xlu0 %v190, 126
    %v197 = vpop.permute.xlu0 %196
    %198 = vrot.lane.b32.xlu0 %v191, 126
    %v199 = vpop.permute.xlu0 %198
    %200 = vrot.lane.b32.xlu0 %v192, 126
    %v201 = vpop.permute.xlu0 %200
    %vm202 = vcmask 1031168
    %v203 = vsel %vm202, %v197, %v199
    %v204 = vsel %vm202, %v199, %v201
    %v207 = vadd.f32 %v188, %v203
    %v208 = vadd.f32 %v189, %v204
    %vm209 = vcmp.lt.s32.totalorder %v157, 15
    %vm210 = vcmp.lt.s32.totalorder %v158, 15
    %v211 = vsel %vm209, 0.24420135, 0.0
    %v212 = vsel %vm210, 0.24420135, 0.0
    %213 = vrot.lane.b32.xlu0 %v159, 125
    %v214 = vpop.permute.xlu0 %213
    %215 = vrot.lane.b32.xlu0 %v160, 125
    %v216 = vpop.permute.xlu0 %215
    %217 = vrot.lane.b32.xlu0 %v167, 125
    %v218 = vpop.permute.xlu0 %217
    %vm219 = vcmask 1022976
    %v220 = vsel %vm219, %v214, %v216
    %v221 = vsel %vm219, %v216, %v218
    %v224 = vmul.f32 %v211, %v220
    %v225 = vmul.f32 %v212, %v221
    %v226 = vadd.f32 %v207, %v224
    %v227 = vadd.f32 %v208, %v225
    %vm228 = vcmp.lt.s32.totalorder %v157, 14
    %vm229 = vcmp.lt.s32.totalorder %v158, 14
    %v230 = vsel %vm228, 0.054488685, 0.0
    %v231 = vsel %vm229, 0.054488685, 0.0
    %232 = vrot.lane.b32.xlu0 %v159, 124
    %v233 = vpop.permute.xlu0 %232
    %234 = vrot.lane.b32.xlu0 %v160, 124
    %v235 = vpop.permute.xlu0 %234
    %236 = vrot.lane.b32.xlu0 %v167, 124
    %v237 = vpop.permute.xlu0 %236
    %vm238 = vcmask 1014784
    %v239 = vsel %vm238, %v233, %v235
    %v240 = vsel %vm238, %v235, %v237
    %v243 = vmul.f32 %v230, %v239
    %v244 = vmul.f32 %v231, %v240
    %v245 = vadd.f32 %v226, %v243
    %v246 = vadd.f32 %v227, %v244
    %247 = vst [vmem:[#allocation7] sm:$0xff] %v245
    %248 = vst [vmem:[#allocation7 + $0x8] sm:$0xff] %v246
    // Predicated region
    $region10: #{tpu_custom_call.1} parent=1 // pred_check
      _
    $region11: #{tpu_custom_call.1} parent=1 // pred_check_branch
      %250 = sbr.rel (0) target = $region13
    $region12: #{tpu_custom_call.1} parent=1 // pred_region
      %s252 = ssub.s32 256, 256
      %253 = vsyncadd [#allocation6], %s252
      %s255 = sshll.u32 [#allocation7], 4
      %s256 = int_to_ptr.vmem [resolvable:$true] %s255
      %258 = dma.vmem_to_hbm [thread:$0]  %s256, 256, %s1, [#allocation6]
    $region13: #{tpu_custom_call.1} parent=1 // pred_fallthru
      _
    // Predicated region
    $region14: #{tpu_custom_call.1} parent=1 // pred_check
      _
    $region15: #{tpu_custom_call.1} parent=1 // pred_check_branch
      %260 = sbr.rel (0) target = $region17
    $region16: #{tpu_custom_call.1} parent=1 // pred_region
      %261 = dma.done [#allocation6], 256
    $region17: #{tpu_custom_call.1} parent=1 // pred_fallthru
      _
    %262 = vsyncpa [#allocation5], 1
    %263 = vsyncpa [#allocation6], 1

</llo_original>
